<compile_context>
chip_gen: v5e
topology: v5e:2x2
jax: 0.10.0
libtpu: 0.0.40
codegen_flags: <defaults>
</compile_context>

<pallas_src>
import numpy as np
import jax
import jax.numpy as jnp
from jax.experimental import pallas as pl
from jax.experimental.pallas import tpu as pltpu


def _round_up(x, m):
    return (x + m - 1) // m * m


def _make_kernel(Wp: int, Rg: int, Cp: int, Cip: int, Lseg: int):
    """Bottleneck kernel for static padded row stride Wp, flat lane count Rg."""
    taps2x2 = [kh * Wp + kw for kh in range(2) for kw in range(2)]
    taps3x3 = [kh * Wp + kw for kh in range(3) for kw in range(3)]
    Kc1, Kc2, Kc3 = 4 * Cp, 9 * Cip, 4 * Cip

    def rot(a, d):
        # result[:, t] = a[:, (t + d) % Rg]  (left-rotate by d lanes, XLU slot).
        k = d % Rg
        if k == 0:
            return a
        return pltpu.roll(a, shift=Rg - k, axis=1)

    def kernel(xg_ref, w_ref, aux_ref, o_ref, stk_ref):
        # xg_ref : (1, Cp, Rg) padded input image, lane-dense flat layout.
        # w_ref  : (R, 3*Lseg) folded conv weights, 128-aligned lane segments.
        # aux_ref: (8+R, Rg)   row 0 = conv1 valid-output mask; rows 8.. hold
        #                      the three bias column vectors in lanes 0..2.
        # o_ref  : (1, Cp, Rg) conv3 output + identity (valid HxW sliced later).
        # stk_ref: (9*Cip, Rg) VMEM scratch for the stacked tap operand.
        xg = xg_ref[0]                              # (Cp, Rg)
        mask = aux_ref[0:1, :]                      # (1, Rg)
        b1 = aux_ref[8:8 + Cip, 0:1]                # (Cip, 1)
        b2 = aux_ref[8:8 + Cip, 1:2]                # (Cip, 1)
        b3 = aux_ref[8:8 + Cp, 2:3]                 # (Cp, 1)

        w1 = w_ref[0:Cip, 0:Kc1]                    # (Cip, 4*Cp)
        w2 = w_ref[0:Cip, Lseg:Lseg + Kc2]          # (Cip, 9*Cip)
        w3 = w_ref[0:Cp, 2 * Lseg:2 * Lseg + Kc3]   # (Cp, 4*Cip)

        def conv(a, w, taps, cin):
            # Fold the K*K taps into the matmul contraction: stage rolled
            # copies in VMEM scratch, then one (Cout, K*K*Cin)@(K*K*Cin, Rg).
            for i, d in enumerate(taps):
                stk_ref[i * cin:(i + 1) * cin, :] = rot(a, d)
            rows = len(taps) * cin
            return jnp.dot(w, stk_ref[0:rows, :],
                           preferred_element_type=jnp.float32)

        xr = jnp.maximum(xg, 0.0)                                      # relu1
        # conv1 (2x2, pad 1): output anchored at grid (1,1); mask re-zeroes its
        # padding ring so it directly feeds conv2.
        t1 = jnp.maximum(conv(xr, w1, taps2x2, Cp) + b1, 0.0) * mask
        # conv2 (3x3, pad 1): output anchored at grid (0,0).
        t2 = jnp.maximum(conv(t1, w2, taps3x3, Cip) + b2, 0.0)
        # conv3 (2x2, pad 0) + bias + residual (x sits at grid offset (2,2)).
        out = conv(t2, w3, taps2x2, Cip) + b3 + rot(xg, 2 * Wp + 2)
        o_ref[0] = out.astype(o_ref.dtype)

    return kernel


def residual_bottleneck_kn(x_nchw, w1, b1, w2, b2, w3, b3):
    """ResidualBottleneckKN forward.  x_nchw: (N, C, H, W) -> (N, C, H, W)."""
    N, C, H, W = x_nchw.shape
    Ci = w1.shape[3]
    Hp, Wp = H + 3, W + 3
    Rv = Hp * Wp                       # valid flat lanes (19*19 = 361)
    Rg = _round_up(Rv, 128)            # lane-dense padded flat axis (384)
    Cp = _round_up(C, 8)               # padded in/out channels
    Cip = _round_up(Ci, 8)             # padded intermediate channels
    R = max(Cp, Cip)
    Kc1, Kc2, Kc3 = 4 * Cp, 9 * Cip, 4 * Cip
    Lseg = _round_up(max(Kc1, Kc2, Kc3), 128)

    # Input slab: x at grid offset (2,2), zero channels C..Cp-1, zero lanes
    # beyond Hp*Wp.  (row/col 1 = conv1 zero pad; row/col 0 keeps tap shifts
    # non-negative.)
    xp = jnp.pad(x_nchw, ((0, 0), (0, Cp - C), (2, 1), (2, 1)))
    xg = jnp.pad(xp.reshape(N, Cp, Rv), ((0, 0), (0, 0), (0, Rg - Rv)))

    # Folded weights (Cout, K*K*Cin), zero-padded channels, packed into one
    # slab with 128-aligned lane segments.
    w1p = jnp.pad(w1, ((0, 0), (0, 0), (0, Cp - C), (0, Cip - Ci)))
    w2p = jnp.pad(w2, ((0, 0), (0, 0), (0, Cip - Ci), (0, Cip - Ci)))
    w3p = jnp.pad(w3, ((0, 0), (0, 0), (0, Cip - Ci), (0, Cp - C)))
    w1f = jnp.transpose(w1p, (3, 0, 1, 2)).reshape(Cip, Kc1)
    w2f = jnp.transpose(w2p, (3, 0, 1, 2)).reshape(Cip, Kc2)
    w3f = jnp.transpose(w3p, (3, 0, 1, 2)).reshape(Cp, Kc3)
    wpack = jnp.zeros((R, 3 * Lseg), jnp.float32)
    wpack = wpack.at[:Cip, 0:Kc1].set(w1f)
    wpack = wpack.at[:Cip, Lseg:Lseg + Kc2].set(w2f)
    wpack = wpack.at[:Cp, 2 * Lseg:2 * Lseg + Kc3].set(w3f)

    # aux slab: row 0 = validity mask of conv1's output region (anchored at
    # grid (1,1)); rows 8.. carry the bias column vectors in lanes 0..2.
    rows = np.arange(Hp)[:, None]
    cols = np.arange(Wp)[None, :]
    m1 = ((rows >= 1) & (rows <= H + 1) & (cols >= 1) & (cols <= W + 1))
    aux_np = np.zeros((8 + R, Rg), np.float32)
    aux_np[0, :Rv] = m1.astype(np.float32).reshape(-1)
    aux = jnp.asarray(aux_np)
    aux = aux.at[8:8 + Ci, 0].set(b1.astype(jnp.float32))
    aux = aux.at[8:8 + Ci, 1].set(b2.astype(jnp.float32))
    aux = aux.at[8:8 + C, 2].set(b3.astype(jnp.float32))

    out_flat = pl.pallas_call(
        _make_kernel(Wp, Rg, Cp, Cip, Lseg),
        out_shape=jax.ShapeDtypeStruct((N, Cp, Rg), x_nchw.dtype),
        grid_spec=pltpu.PrefetchScalarGridSpec(
            num_scalar_prefetch=0,
            grid=(N,),
            in_specs=[
                pl.BlockSpec((1, Cp, Rg), lambda n: (n, 0, 0)),    # image slab
                pl.BlockSpec((R, 3 * Lseg), lambda n: (0, 0)),     # weights
                pl.BlockSpec((8 + R, Rg), lambda n: (0, 0)),       # bias+mask
            ],
            out_specs=pl.BlockSpec((1, Cp, Rg), lambda n: (n, 0, 0)),
            scratch_shapes=[pltpu.VMEM((9 * Cip, Rg), jnp.float32)],
        ),
        compiler_params=pltpu.CompilerParams(
            dimension_semantics=("parallel",)),
    )(xg, wpack, aux)

    # TODO(synk): in a fused multi-block KNResNet50 the padded (Cp, Rg) slab
    # would be fed directly to the next bottleneck (it already needs the pad
    # ring); slice back to (N, C, H, W) only because this script returns NCHW.
    return out_flat[:, :C, :Rv].reshape(N, C, Hp, Wp)[:, :, :H, :W]


def reference(x, w1, b1, w2, b2, w3, b3):
    """Pure-JAX reference mirroring the PyTorch forward (eval mode)."""
    def conv(y, w, pad):
        w_oihw = jnp.transpose(w, (3, 2, 0, 1))
        return jax.lax.conv_general_dilated(
            y, w_oihw, window_strides=(1, 1), padding=(pad, pad),
            dimension_numbers=("NCHW", "OIHW", "NCHW"))

    y = jnp.maximum(x, 0.0)
    y = conv(y, w1, (1, 1)) + b1.reshape(1, -1, 1, 1)
    y = jnp.maximum(y, 0.0)
    y = conv(y, w2, (1, 1)) + b2.reshape(1, -1, 1, 1)
    y = jnp.maximum(y, 0.0)
    y = conv(y, w3, (0, 0)) + b3.reshape(1, -1, 1, 1)
    return y + x


if __name__ == "__main__":
    key = jax.random.PRNGKey(0)
    kx, k1, k2, k3, k4, k5, k6 = jax.random.split(key, 7)

    N, C, H, W = 2, 4, 16, 16   # batch, channels, spatial
    Ci = 8                      # inter_channels

    x = jax.random.normal(kx, (N, C, H, W), dtype=jnp.float32)
    w1 = 0.1 * jax.random.normal(k1, (2, 2, C, Ci), dtype=jnp.float32)
    b1 = 0.1 * jax.random.normal(k2, (Ci,), dtype=jnp.float32)
    w2 = 0.1 * jax.random.normal(k3, (3, 3, Ci, Ci), dtype=jnp.float32)
    b2 = 0.1 * jax.random.normal(k4, (Ci,), dtype=jnp.float32)
    w3 = 0.1 * jax.random.normal(k5, (2, 2, Ci, C), dtype=jnp.float32)
    b3 = 0.1 * jax.random.normal(k6, (C,), dtype=jnp.float32)

    out = jax.block_until_ready(
        residual_bottleneck_kn(x, w1, b1, w2, b2, w3, b3))
    ref = reference(x, w1, b1, w2, b2, w3, b3)
    np.testing.assert_allclose(np.asarray(out), np.asarray(ref),
                               rtol=2e-3, atol=2e-3)
    print("KERNEL_OK")
</pallas_src>

<mosaic_0001>
module attributes {stable_mosaic.version = 11 : i64} {
  func.func @kernel(%arg0: i32, %arg1: memref<1x8x384xf32, #tpu.memory_space<vmem>>, %arg2: memref<8x384xf32, #tpu.memory_space<vmem>>, %arg3: memref<16x384xf32, #tpu.memory_space<vmem>>, %arg4: memref<1x8x384xf32, #tpu.memory_space<vmem>>, %arg5: memref<72x384xf32, #tpu.memory_space<vmem>>) attributes {dimension_semantics = [#tpu.dimension_semantics<parallel>], iteration_bounds = array<i64: 2>, scalar_prefetch = 0 : i64, scratch_operands = 1 : i64, tpu.core_type = #tpu.core_type<tc>, window_params = [{transform_indices = @transform_0, window_bounds = array<i64: 1, 8, 384>}, {pipeline_mode = #tpu.pipeline_mode<synchronous>, transform_indices = @transform_1, window_bounds = array<i64: 8, 384>}, {pipeline_mode = #tpu.pipeline_mode<synchronous>, transform_indices = @transform_2, window_bounds = array<i64: 16, 384>}, {transform_indices = @transform_3, window_bounds = array<i64: 1, 8, 384>}]} {
    %c0 = arith.constant 0 : index
    %c0_0 = arith.constant 0 : index
    %c0_1 = arith.constant 0 : index
    %0 = vector.load %arg1[%c0, %c0_0, %c0_1] : memref<1x8x384xf32, #tpu.memory_space<vmem>>, vector<1x8x384xf32>
    %1 = vector.shape_cast %0 : vector<1x8x384xf32> to vector<8x384xf32>
    %c0_2 = arith.constant 0 : index
    %c0_3 = arith.constant 0 : index
    %2 = vector.load %arg3[%c0_2, %c0_3] : memref<16x384xf32, #tpu.memory_space<vmem>>, vector<1x384xf32>
    %c8 = arith.constant 8 : index
    %c0_4 = arith.constant 0 : index
    %3 = vector.load %arg3[%c8, %c0_4] : memref<16x384xf32, #tpu.memory_space<vmem>>, vector<8x1xf32>
    %c8_5 = arith.constant 8 : index
    %c1 = arith.constant 1 : index
    %4 = vector.load %arg3[%c8_5, %c1] : memref<16x384xf32, #tpu.memory_space<vmem>>, vector<8x1xf32>
    %c8_6 = arith.constant 8 : index
    %c2 = arith.constant 2 : index
    %5 = vector.load %arg3[%c8_6, %c2] : memref<16x384xf32, #tpu.memory_space<vmem>>, vector<8x1xf32>
    %c0_7 = arith.constant 0 : index
    %c0_8 = arith.constant 0 : index
    %6 = vector.load %arg2[%c0_7, %c0_8] : memref<8x384xf32, #tpu.memory_space<vmem>>, vector<8x32xf32>
    %c0_9 = arith.constant 0 : index
    %c128 = arith.constant 128 : index
    %7 = vector.load %arg2[%c0_9, %c128] : memref<8x384xf32, #tpu.memory_space<vmem>>, vector<8x72xf32>
    %c0_10 = arith.constant 0 : index
    %c256 = arith.constant 256 : index
    %8 = vector.load %arg2[%c0_10, %c256] : memref<8x384xf32, #tpu.memory_space<vmem>>, vector<8x32xf32>
    %cst = arith.constant 0.000000e+00 : f32
    %9 = vector.broadcast %cst : f32 to vector<8x384xf32>
    %10 = arith.maximumf %1, %9 : vector<8x384xf32>
    %c0_11 = arith.constant 0 : index
    %c0_12 = arith.constant 0 : index
    %11 = vector.load %arg5[%c0_11, %c0_12] : memref<72x384xf32, #tpu.memory_space<vmem>>, vector<8x384xf32>
    tpu.vector_store %arg5[%c0_11, %c0_12], %10 {strides = array<i32>} : memref<72x384xf32, #tpu.memory_space<vmem>>, vector<8x384xf32>,
    %c383_i32 = arith.constant 383 : i32
    %12 = tpu.dynamic_rotate %10 by %c383_i32 dim 1 : vector<8x384xf32>, i32 -> vector<8x384xf32>
    %c8_13 = arith.constant 8 : index
    %c0_14 = arith.constant 0 : index
    %13 = vector.load %arg5[%c8_13, %c0_14] : memref<72x384xf32, #tpu.memory_space<vmem>>, vector<8x384xf32>
    tpu.vector_store %arg5[%c8_13, %c0_14], %12 {strides = array<i32>} : memref<72x384xf32, #tpu.memory_space<vmem>>, vector<8x384xf32>,
    %c365_i32 = arith.constant 365 : i32
    %14 = tpu.dynamic_rotate %10 by %c365_i32 dim 1 : vector<8x384xf32>, i32 -> vector<8x384xf32>
    %c16 = arith.constant 16 : index
    %c0_15 = arith.constant 0 : index
    %15 = vector.load %arg5[%c16, %c0_15] : memref<72x384xf32, #tpu.memory_space<vmem>>, vector<8x384xf32>
    tpu.vector_store %arg5[%c16, %c0_15], %14 {strides = array<i32>} : memref<72x384xf32, #tpu.memory_space<vmem>>, vector<8x384xf32>,
    %c364_i32 = arith.constant 364 : i32
    %16 = tpu.dynamic_rotate %10 by %c364_i32 dim 1 : vector<8x384xf32>, i32 -> vector<8x384xf32>
    %c24 = arith.constant 24 : index
    %c0_16 = arith.constant 0 : index
    %17 = vector.load %arg5[%c24, %c0_16] : memref<72x384xf32, #tpu.memory_space<vmem>>, vector<8x384xf32>
    tpu.vector_store %arg5[%c24, %c0_16], %16 {strides = array<i32>} : memref<72x384xf32, #tpu.memory_space<vmem>>, vector<8x384xf32>,
    %c0_17 = arith.constant 0 : index
    %c0_18 = arith.constant 0 : index
    %18 = vector.load %arg5[%c0_17, %c0_18] : memref<72x384xf32, #tpu.memory_space<vmem>>, vector<32x384xf32>
    %cst_19 = arith.constant dense<0.000000e+00> : vector<8x384xf32>
    %19 = tpu.matmul %6, %18, %cst_19 {dimension_numbers = #tpu.dot_dimension_numbers<[1], [0], [0], [1], [0, 0, 1, 1], [], []>} : vector<8x32xf32>, vector<32x384xf32>, vector<8x384xf32> -> vector<8x384xf32>
    %20 = vector.broadcast %3 : vector<8x1xf32> to vector<8x384xf32>
    %21 = arith.addf %19, %20 : vector<8x384xf32>
    %cst_20 = arith.constant 0.000000e+00 : f32
    %22 = vector.broadcast %cst_20 : f32 to vector<8x384xf32>
    %23 = arith.maximumf %21, %22 : vector<8x384xf32>
    %24 = vector.broadcast %2 : vector<1x384xf32> to vector<8x384xf32>
    %25 = arith.mulf %23, %24 : vector<8x384xf32>
    %c0_21 = arith.constant 0 : index
    %c0_22 = arith.constant 0 : index
    %26 = vector.load %arg5[%c0_21, %c0_22] : memref<72x384xf32, #tpu.memory_space<vmem>>, vector<8x384xf32>
    tpu.vector_store %arg5[%c0_21, %c0_22], %25 {strides = array<i32>} : memref<72x384xf32, #tpu.memory_space<vmem>>, vector<8x384xf32>,
    %c383_i32_23 = arith.constant 383 : i32
    %27 = tpu.dynamic_rotate %25 by %c383_i32_23 dim 1 : vector<8x384xf32>, i32 -> vector<8x384xf32>
    %c8_24 = arith.constant 8 : index
    %c0_25 = arith.constant 0 : index
    %28 = vector.load %arg5[%c8_24, %c0_25] : memref<72x384xf32, #tpu.memory_space<vmem>>, vector<8x384xf32>
    tpu.vector_store %arg5[%c8_24, %c0_25], %27 {strides = array<i32>} : memref<72x384xf32, #tpu.memory_space<vmem>>, vector<8x384xf32>,
    %c382_i32 = arith.constant 382 : i32
    %29 = tpu.dynamic_rotate %25 by %c382_i32 dim 1 : vector<8x384xf32>, i32 -> vector<8x384xf32>
    %c16_26 = arith.constant 16 : index
    %c0_27 = arith.constant 0 : index
    %30 = vector.load %arg5[%c16_26, %c0_27] : memref<72x384xf32, #tpu.memory_space<vmem>>, vector<8x384xf32>
    tpu.vector_store %arg5[%c16_26, %c0_27], %29 {strides = array<i32>} : memref<72x384xf32, #tpu.memory_space<vmem>>, vector<8x384xf32>,
    %c365_i32_28 = arith.constant 365 : i32
    %31 = tpu.dynamic_rotate %25 by %c365_i32_28 dim 1 : vector<8x384xf32>, i32 -> vector<8x384xf32>
    %c24_29 = arith.constant 24 : index
    %c0_30 = arith.constant 0 : index
    %32 = vector.load %arg5[%c24_29, %c0_30] : memref<72x384xf32, #tpu.memory_space<vmem>>, vector<8x384xf32>
    tpu.vector_store %arg5[%c24_29, %c0_30], %31 {strides = array<i32>} : memref<72x384xf32, #tpu.memory_space<vmem>>, vector<8x384xf32>,
    %c364_i32_31 = arith.constant 364 : i32
    %33 = tpu.dynamic_rotate %25 by %c364_i32_31 dim 1 : vector<8x384xf32>, i32 -> vector<8x384xf32>
    %c32 = arith.constant 32 : index
    %c0_32 = arith.constant 0 : index
    %34 = vector.load %arg5[%c32, %c0_32] : memref<72x384xf32, #tpu.memory_space<vmem>>, vector<8x384xf32>
    tpu.vector_store %arg5[%c32, %c0_32], %33 {strides = array<i32>} : memref<72x384xf32, #tpu.memory_space<vmem>>, vector<8x384xf32>,
    %c363_i32 = arith.constant 363 : i32
    %35 = tpu.dynamic_rotate %25 by %c363_i32 dim 1 : vector<8x384xf32>, i32 -> vector<8x384xf32>
    %c40 = arith.constant 40 : index
    %c0_33 = arith.constant 0 : index
    %36 = vector.load %arg5[%c40, %c0_33] : memref<72x384xf32, #tpu.memory_space<vmem>>, vector<8x384xf32>
    tpu.vector_store %arg5[%c40, %c0_33], %35 {strides = array<i32>} : memref<72x384xf32, #tpu.memory_space<vmem>>, vector<8x384xf32>,
    %c346_i32 = arith.constant 346 : i32
    %37 = tpu.dynamic_rotate %25 by %c346_i32 dim 1 : vector<8x384xf32>, i32 -> vector<8x384xf32>
    %c48 = arith.constant 48 : index
    %c0_34 = arith.constant 0 : index
    %38 = vector.load %arg5[%c48, %c0_34] : memref<72x384xf32, #tpu.memory_space<vmem>>, vector<8x384xf32>
    tpu.vector_store %arg5[%c48, %c0_34], %37 {strides = array<i32>} : memref<72x384xf32, #tpu.memory_space<vmem>>, vector<8x384xf32>,
    %c345_i32 = arith.constant 345 : i32
    %39 = tpu.dynamic_rotate %25 by %c345_i32 dim 1 : vector<8x384xf32>, i32 -> vector<8x384xf32>
    %c56 = arith.constant 56 : index
    %c0_35 = arith.constant 0 : index
    %40 = vector.load %arg5[%c56, %c0_35] : memref<72x384xf32, #tpu.memory_space<vmem>>, vector<8x384xf32>
    tpu.vector_store %arg5[%c56, %c0_35], %39 {strides = array<i32>} : memref<72x384xf32, #tpu.memory_space<vmem>>, vector<8x384xf32>,
    %c344_i32 = arith.constant 344 : i32
    %41 = tpu.dynamic_rotate %25 by %c344_i32 dim 1 : vector<8x384xf32>, i32 -> vector<8x384xf32>
    %c64 = arith.constant 64 : index
    %c0_36 = arith.constant 0 : index
    %42 = vector.load %arg5[%c64, %c0_36] : memref<72x384xf32, #tpu.memory_space<vmem>>, vector<8x384xf32>
    tpu.vector_store %arg5[%c64, %c0_36], %41 {strides = array<i32>} : memref<72x384xf32, #tpu.memory_space<vmem>>, vector<8x384xf32>,
    %c0_37 = arith.constant 0 : index
    %c0_38 = arith.constant 0 : index
    %43 = vector.load %arg5[%c0_37, %c0_38] : memref<72x384xf32, #tpu.memory_space<vmem>>, vector<72x384xf32>
    %cst_39 = arith.constant dense<0.000000e+00> : vector<8x384xf32>
    %44 = tpu.matmul %7, %43, %cst_39 {dimension_numbers = #tpu.dot_dimension_numbers<[1], [0], [0], [1], [0, 0, 1, 1], [], []>} : vector<8x72xf32>, vector<72x384xf32>, vector<8x384xf32> -> vector<8x384xf32>
    %45 = vector.broadcast %4 : vector<8x1xf32> to vector<8x384xf32>
    %46 = arith.addf %44, %45 : vector<8x384xf32>
    %cst_40 = arith.constant 0.000000e+00 : f32
    %47 = vector.broadcast %cst_40 : f32 to vector<8x384xf32>
    %48 = arith.maximumf %46, %47 : vector<8x384xf32>
    %c0_41 = arith.constant 0 : index
    %c0_42 = arith.constant 0 : index
    %49 = vector.load %arg5[%c0_41, %c0_42] : memref<72x384xf32, #tpu.memory_space<vmem>>, vector<8x384xf32>
    tpu.vector_store %arg5[%c0_41, %c0_42], %48 {strides = array<i32>} : memref<72x384xf32, #tpu.memory_space<vmem>>, vector<8x384xf32>,
    %c383_i32_43 = arith.constant 383 : i32
    %50 = tpu.dynamic_rotate %48 by %c383_i32_43 dim 1 : vector<8x384xf32>, i32 -> vector<8x384xf32>
    %c8_44 = arith.constant 8 : index
    %c0_45 = arith.constant 0 : index
    %51 = vector.load %arg5[%c8_44, %c0_45] : memref<72x384xf32, #tpu.memory_space<vmem>>, vector<8x384xf32>
    tpu.vector_store %arg5[%c8_44, %c0_45], %50 {strides = array<i32>} : memref<72x384xf32, #tpu.memory_space<vmem>>, vector<8x384xf32>,
    %c365_i32_46 = arith.constant 365 : i32
    %52 = tpu.dynamic_rotate %48 by %c365_i32_46 dim 1 : vector<8x384xf32>, i32 -> vector<8x384xf32>
    %c16_47 = arith.constant 16 : index
    %c0_48 = arith.constant 0 : index
    %53 = vector.load %arg5[%c16_47, %c0_48] : memref<72x384xf32, #tpu.memory_space<vmem>>, vector<8x384xf32>
    tpu.vector_store %arg5[%c16_47, %c0_48], %52 {strides = array<i32>} : memref<72x384xf32, #tpu.memory_space<vmem>>, vector<8x384xf32>,
    %c364_i32_49 = arith.constant 364 : i32
    %54 = tpu.dynamic_rotate %48 by %c364_i32_49 dim 1 : vector<8x384xf32>, i32 -> vector<8x384xf32>
    %c24_50 = arith.constant 24 : index
    %c0_51 = arith.constant 0 : index
    %55 = vector.load %arg5[%c24_50, %c0_51] : memref<72x384xf32, #tpu.memory_space<vmem>>, vector<8x384xf32>
    tpu.vector_store %arg5[%c24_50, %c0_51], %54 {strides = array<i32>} : memref<72x384xf32, #tpu.memory_space<vmem>>, vector<8x384xf32>,
    %c0_52 = arith.constant 0 : index
    %c0_53 = arith.constant 0 : index
    %56 = vector.load %arg5[%c0_52, %c0_53] : memref<72x384xf32, #tpu.memory_space<vmem>>, vector<32x384xf32>
    %cst_54 = arith.constant dense<0.000000e+00> : vector<8x384xf32>
    %57 = tpu.matmul %8, %56, %cst_54 {dimension_numbers = #tpu.dot_dimension_numbers<[1], [0], [0], [1], [0, 0, 1, 1], [], []>} : vector<8x32xf32>, vector<32x384xf32>, vector<8x384xf32> -> vector<8x384xf32>
    %58 = vector.broadcast %5 : vector<8x1xf32> to vector<8x384xf32>
    %59 = arith.addf %57, %58 : vector<8x384xf32>
    %c344_i32_55 = arith.constant 344 : i32
    %60 = tpu.dynamic_rotate %1 by %c344_i32_55 dim 1 : vector<8x384xf32>, i32 -> vector<8x384xf32>
    %61 = arith.addf %59, %60 : vector<8x384xf32>
    %c0_56 = arith.constant 0 : index
    %c0_57 = arith.constant 0 : index
    %c0_58 = arith.constant 0 : index
    %62 = vector.load %arg4[%c0_56, %c0_57, %c0_58] : memref<1x8x384xf32, #tpu.memory_space<vmem>>, vector<1x8x384xf32>
    %63 = vector.shape_cast %62 : vector<1x8x384xf32> to vector<8x384xf32>
    %64 = vector.shape_cast %61 : vector<8x384xf32> to vector<1x8x384xf32>
    tpu.vector_store %arg4[%c0_56, %c0_57, %c0_58], %64 {strides = array<i32>} : memref<1x8x384xf32, #tpu.memory_space<vmem>>, vector<1x8x384xf32>,
    return
  }
  func.func @transform_0(%arg0: i32) -> (i32, i32, i32) {
    %c0_i32 = arith.constant 0 : i32
    %c0_i32_0 = arith.constant 0 : i32
    %c0_i32_1 = arith.constant 0 : i32
    return %arg0, %c0_i32, %c0_i32_0 : i32, i32, i32
  }
  func.func @transform_1(%arg0: i32) -> (i32, i32) {
    %c0_i32 = arith.constant 0 : i32
    %c0_i32_0 = arith.constant 0 : i32
    %c0_i32_1 = arith.constant 0 : i32
    return %c0_i32, %c0_i32_0 : i32, i32
  }
  func.func @transform_2(%arg0: i32) -> (i32, i32) {
    %c0_i32 = arith.constant 0 : i32
    %c0_i32_0 = arith.constant 0 : i32
    %c0_i32_1 = arith.constant 0 : i32
    return %c0_i32, %c0_i32_0 : i32, i32
  }
  func.func @transform_3(%arg0: i32) -> (i32, i32, i32) {
    %c0_i32 = arith.constant 0 : i32
    %c0_i32_0 = arith.constant 0 : i32
    %c0_i32_1 = arith.constant 0 : i32
    return %arg0, %c0_i32, %c0_i32_0 : i32, i32, i32
  }
}

</mosaic_0001>

<llo_original>
// kernel: tpu_custom_call.1
$region0: #{tpu_custom_call.1}
  #allocation0 [shape = 'u32[]', space=smem, size = 0x4, offset = 0x4, fixed_abs, tag = 'smem constant byte address 0x4 - core index']
  #allocation1 [shape = 'u32[72,128]{1,0:T(1,128)}', space=vmem, size = 0x9000, scoped, tag = 'internal scratch']
  #allocation2 [shape = 'f32[72,384]{1,0:T(8,128)}', space=vmem, size = 0x1b000, scoped, tag = 'scratch operand']
  %s0 = inlined_call_operand.hbm [shape: f32[2,8,384], index: 0, kind: input, shape index: {}]
  %s1 = inlined_call_operand.hbm [shape: f32[8,384], index: 1, kind: input, shape index: {}]
  %s2 = inlined_call_operand.hbm [shape: f32[16,384], index: 2, kind: input, shape index: {}]
  %s3 = inlined_call_operand.hbm [shape: f32[2,8,384], index: 3, kind: output, shape index: {}]
  %s4 = sld [smem:[#allocation0]]
  $region57: #{tpu_custom_call.1} parent=0
    _
  %s6 = ssub.s32 1, %s4
  %s7 = scalar_select 0, %s6, %s4
  $region1: #{tpu_custom_call.1} parent=0
    #allocation3 [shape = 'u8[24576]{0}', space=vmem, size = 0x6000, scoped, tag = 'input window, operand 0']
    #allocation4 [shape = 's32[2]{0}', space=sflag, size = 0x8, scoped, tag = 'scoped memory for tpu_custom_call.1']
    #allocation5 [shape = 's32[2]{0}', space=sflag, size = 0x8, scoped, tag = 'scoped memory for tpu_custom_call.1']
    #allocation6 [shape = 'u8[12288]{0}', space=vmem, size = 0x3000, scoped, tag = 'input window, operand 1, single buffered']
    #allocation7 [shape = 's32[1]{0}', space=sflag, size = 0x4, scoped, tag = 'scoped memory for tpu_custom_call.1']
    #allocation8 [shape = 'u8[24576]{0}', space=vmem, size = 0x6000, scoped, tag = 'input window, operand 2, single buffered']
    #allocation9 [shape = 'u8[24576]{0}', space=vmem, size = 0x6000, scoped, tag = 'output window, operand 0']
    %8 = vsyncpa [#allocation4], 0
    %s9 = scalar_lea.sflag [#allocation4], 1
    %10 = vsyncpa %s9, 0
    %11 = vsyncpa [#allocation7], 0
    %12 = vsyncpa [#allocation5], 0
    %s13 = scalar_lea.sflag [#allocation5], 1
    %14 = vsyncpa %s13, 0
    loop: start=0, step=1, limit=4
    $region2: #{tpu_custom_call.1} parent=1 // loop_pre_header
      _
    $region3: #{tpu_custom_call.1} parent=1 // loop_header
      %s16 = sphi 0, %s20
      %p17 = scmp.ge.s32.totalorder %s16, 4
      %s26 = sphi 0, %s28
      %s29 = sphi 0, %s26
      %s30 = sphi 0, %s29
      %s46 = sphi 0, %s30
      %s50 = sphi 0, %s50
      %s52 = sphi 0, %s50
      %s53 = sphi 0, %s52
      %s67 = sphi 0, %s53
      %s71 = sphi 0, %s71
      %s73 = sphi 0, %s71
      %s74 = sphi 0, %s73
      %s88 = sphi 0, %s74
      %s94 = sphi 0, %s96
      %s97 = sphi 0, %s94
      %s98 = sphi 0, %s97
      %s114 = sphi 0, %s98
    $region4: #{tpu_custom_call.1} parent=1 // loop_header_branch
      %19 = sbr.rel (%p17) target = $region8
    $region5: #{tpu_custom_call.1} parent=1 // loop_body
      %s21 = ssub.s32 %s16, 1
      %s22 = ssub.s32 %s16, 2
      %s23 = sadd.s32 %s16, 1
      %s24 = ssub.s32 %s16, %s23
      %p25 = scmp.eq.s32.totalorder %s24, 0
      %s27 = sadd.s32 %s26, 1
      %s28 = scalar_select %p25, %s26, %s27
      %p31 = pneg %p25
      %p32 = scmp.eq.s32.totalorder %s16, 1
      %p33 = por %p31, %p32
      %p34 = scmp.ne.s32.totalorder %s26, %s29
      %p35 = scmp.eq.s32.totalorder %s16, 0
      %p36 = por %p34, %p35
      %p37 = scmp.ne.s32.totalorder %s26, %s29
      %p38 = scmp.eq.s32.totalorder %s21, 1
      %p39 = por %p37, %p38
      %p40 = scmp.ne.s32.totalorder %s29, %s30
      %p41 = scmp.eq.s32.totalorder %s21, 0
      %p42 = por %p40, %p41
      %p43 = scmp.ne.s32.totalorder %s29, %s30
      %p44 = scmp.eq.s32.totalorder %s22, 1
      %p45 = por %p43, %p44
      %p47 = scmp.ne.s32.totalorder %s30, %s46
      %p48 = scmp.eq.s32.totalorder %s22, 0
      %p49 = por %p47, %p48
      %s51 = sadd.s32 %s50, 1
      %p54 = scmp.eq.s32.totalorder %s16, 1
      %p55 = scmp.ne.s32.totalorder %s50, %s52
      %p56 = scmp.eq.s32.totalorder %s16, 0
      %p57 = por %p55, %p56
      %p58 = scmp.ne.s32.totalorder %s50, %s52
      %p59 = scmp.eq.s32.totalorder %s21, 1
      %p60 = por %p58, %p59
      %p61 = scmp.ne.s32.totalorder %s52, %s53
      %p62 = scmp.eq.s32.totalorder %s21, 0
      %p63 = por %p61, %p62
      %p64 = scmp.ne.s32.totalorder %s52, %s53
      %p65 = scmp.eq.s32.totalorder %s22, 1
      %p66 = por %p64, %p65
      %p68 = scmp.ne.s32.totalorder %s53, %s67
      %p69 = scmp.eq.s32.totalorder %s22, 0
      %p70 = por %p68, %p69
      %s72 = sadd.s32 %s71, 1
      %p75 = scmp.eq.s32.totalorder %s16, 1
      %p76 = scmp.ne.s32.totalorder %s71, %s73
      %p77 = scmp.eq.s32.totalorder %s16, 0
      %p78 = por %p76, %p77
      %p79 = scmp.ne.s32.totalorder %s71, %s73
      %p80 = scmp.eq.s32.totalorder %s21, 1
      %p81 = por %p79, %p80
      %p82 = scmp.ne.s32.totalorder %s73, %s74
      %p83 = scmp.eq.s32.totalorder %s21, 0
      %p84 = por %p82, %p83
      %p85 = scmp.ne.s32.totalorder %s73, %s74
      %p86 = scmp.eq.s32.totalorder %s22, 1
      %p87 = por %p85, %p86
      %p89 = scmp.ne.s32.totalorder %s74, %s88
      %p90 = scmp.eq.s32.totalorder %s22, 0
      %p91 = por %p89, %p90
      %s92 = ssub.s32 %s16, %s23
      %p93 = scmp.eq.s32.totalorder %s92, 0
      %s95 = sadd.s32 %s94, 1
      %s96 = scalar_select %p93, %s94, %s95
      %p99 = pneg %p93
      %p100 = scmp.eq.s32.totalorder %s16, 1
      %p101 = por %p99, %p100
      %p102 = scmp.ne.s32.totalorder %s94, %s97
      %p103 = scmp.eq.s32.totalorder %s16, 0
      %p104 = por %p102, %p103
      %p105 = scmp.ne.s32.totalorder %s94, %s97
      %p106 = scmp.eq.s32.totalorder %s21, 1
      %p107 = por %p105, %p106
      %p108 = scmp.ne.s32.totalorder %s97, %s98
      %p109 = scmp.eq.s32.totalorder %s21, 0
      %p110 = por %p108, %p109
      %p111 = scmp.ne.s32.totalorder %s97, %s98
      %p112 = scmp.eq.s32.totalorder %s22, 1
      %p113 = por %p111, %p112
      %p115 = scmp.ne.s32.totalorder %s98, %s114
      %p116 = scmp.eq.s32.totalorder %s22, 0
      %p117 = por %p115, %p116
      %p118 = scmp.le.s32.totalorder 1, %s16
      %p119 = scmp.lt.s32.totalorder %s16, 3
      %p120 = pnand %p118, %p119
      %p121 = pneg %p120
      // Predicated region
      $region9: #{tpu_custom_call.1} parent=5 // pred_check
        _
      $region10: #{tpu_custom_call.1} parent=5 // pred_check_branch
        %123 = sbr.rel (%p120) target = $region12
      $region11: #{tpu_custom_call.1} parent=5 // pred_region
        %s124 = ssub.s32 %s16, 1
        // Predicated region
        $region13: #{tpu_custom_call.1} parent=11 // pred_check
          %p125 = pneg %p63
        $region14: #{tpu_custom_call.1} parent=11 // pred_check_branch
          %127 = sbr.rel (%p125) target = $region16
        $region15: #{tpu_custom_call.1} parent=11 // pred_region
          %129 = vsyncadd [#allocation7], 0
          %s131 = sshll.u32 %s1, 4
          %s132 = int_to_ptr.hbm [resolvable:$true] %s131
          %s133 = sshll.u32 [#allocation6], 4
          %s134 = int_to_ptr.vmem [resolvable:$true] %s133
          %136 = dma.hbm_to_vmem [thread:$0]  %s132, 384, %s134, [#allocation7]
        $region16: #{tpu_custom_call.1} parent=11 // pred_fallthru
          _
        // Predicated region
        $region17: #{tpu_custom_call.1} parent=11 // pred_check
          %p137 = pneg %p84
        $region18: #{tpu_custom_call.1} parent=11 // pred_check_branch
          %139 = sbr.rel (%p137) target = $region20
        $region19: #{tpu_custom_call.1} parent=11 // pred_region
          %141 = vsyncadd [#allocation7], 0
          %s142 = sshll.u32 %s2, 4
          %s143 = int_to_ptr.hbm [resolvable:$true] %s142
          %s144 = sshll.u32 [#allocation8], 4
          %s145 = int_to_ptr.vmem [resolvable:$true] %s144
          %150 = dma.hbm_to_vmem [thread:$0]  %s143, 768, %s145, [#allocation7], 384, 384, 24
        $region20: #{tpu_custom_call.1} parent=11 // pred_fallthru
          _
      $region12: #{tpu_custom_call.1} parent=5 // pred_fallthru
        _
      %p151 = scmp.lt.s32.totalorder %s16, 2
      // Predicated region
      $region21: #{tpu_custom_call.1} parent=5 // pred_check
        %p152 = pneg %p151
      $region22: #{tpu_custom_call.1} parent=5 // pred_check_branch
        %154 = sbr.rel (%p152) target = $region24
      $region23: #{tpu_custom_call.1} parent=5 // pred_region
        // Predicated region
        $region25: #{tpu_custom_call.1} parent=23 // pred_check
          %p155 = pneg %p36
        $region26: #{tpu_custom_call.1} parent=23 // pred_check_branch
          %157 = sbr.rel (%p155) target = $region28
        $region27: #{tpu_custom_call.1} parent=23 // pred_region
          %s158 = sand.u32 %s26, 1
          %s159 = scalar_lea.sflag [#allocation4], %s158
          %s160 = sand.u32 %s26, 1
          %s161 = smul.addr %s160, 24
          %s162 = scalar_lea.vmem [#allocation3], %s161
          %164 = vsyncadd %s159, 0
          %s165 = smul.addr %s16, 3
          %s166 = smul.addr %s165, 8
          %s167 = scalar_lea.hbm %s0, %s166
          %s169 = sshll.u32 %s167, 4
          %s170 = int_to_ptr.hbm [resolvable:$true] %s169
          %s171 = sshll.u32 %s162, 4
          %s172 = int_to_ptr.vmem [resolvable:$true] %s171
          %174 = dma.hbm_to_vmem [thread:$0]  %s170, 384, %s172, %s159
        $region28: #{tpu_custom_call.1} parent=23 // pred_fallthru
          _
      $region24: #{tpu_custom_call.1} parent=5 // pred_fallthru
        _
      %p175 = scmp.le.s32.totalorder 1, %s16
      %p176 = scmp.lt.s32.totalorder %s16, 3
      %p177 = pnand %p175, %p176
      %p178 = pneg %p177
      // Predicated region
      $region29: #{tpu_custom_call.1} parent=5 // pred_check
        _
      $region30: #{tpu_custom_call.1} parent=5 // pred_check_branch
        %180 = sbr.rel (%p177) target = $region32
      $region31: #{tpu_custom_call.1} parent=5 // pred_region
        %s181 = ssub.s32 %s16, 1
        %s182 = sand.u32 %s29, 1
        %s183 = scalar_lea.sflag [#allocation4], %s182
        %s184 = sand.u32 %s29, 1
        %s185 = smul.addr %s184, 24
        %s186 = scalar_lea.vmem [#allocation3], %s185
        // Predicated region
        $region33: #{tpu_custom_call.1} parent=31 // pred_check
          %p187 = pneg %p42
        $region34: #{tpu_custom_call.1} parent=31 // pred_check_branch
          %189 = sbr.rel (%p187) target = $region36
        $region35: #{tpu_custom_call.1} parent=31 // pred_region
          %191 = dma.done %s183, 384
        $region36: #{tpu_custom_call.1} parent=31 // pred_fallthru
          _
        // Predicated region
        $region37: #{tpu_custom_call.1} parent=31 // pred_check
          %p192 = pneg %p63
        $region38: #{tpu_custom_call.1} parent=31 // pred_check_branch
          %194 = sbr.rel (%p192) target = $region40
        $region39: #{tpu_custom_call.1} parent=31 // pred_region
          %196 = dma.done [#allocation7], 384
        $region40: #{tpu_custom_call.1} parent=31 // pred_fallthru
          _
        // Predicated region
        $region41: #{tpu_custom_call.1} parent=31 // pred_check
          %p197 = pneg %p84
        $region42: #{tpu_custom_call.1} parent=31 // pred_check_branch
          %199 = sbr.rel (%p197) target = $region44
        $region43: #{tpu_custom_call.1} parent=31 // pred_region
          %201 = dma.done [#allocation7], 768
        $region44: #{tpu_custom_call.1} parent=31 // pred_fallthru
          _
        %s202 = sand.u32 %s29, 1
        %s203 = scalar_lea.sflag [#allocation4], %s202
        %s204 = sand.u32 %s29, 1
        %s205 = smul.addr %s204, 24
        %s206 = scalar_lea.vmem [#allocation3], %s205
        %p207 = pneg %p42
        %p208 = pneg %p39
        %p209 = pneg %p63
        %p210 = pneg %p60
        %p211 = pneg %p84
        %p212 = pneg %p81
        %p213 = pneg %p110
        %p214 = pneg %p107
        %s215 = sand.u32 %s97, 1
        %s216 = scalar_lea.sflag [#allocation5], %s215
        %s217 = sand.u32 %s97, 1
        %s218 = smul.addr %s217, 24
        %s219 = scalar_lea.vmem [#allocation9], %s218
        %v220 = vld [vmem:[%s186] sm:$0xff]
        %v221 = vld [vmem:[%s186 + $0x8] sm:$0xff]
        %v222 = vld [vmem:[%s186 + $0x10] sm:$0xff]
        %v223 = vld [vmem:[#allocation8] ss:$8 sm:$0x7]
        %v224 = vld [vmem:[#allocation8 + $0x18] sm:$0xff]
        %v225 = vld [vmem:[#allocation6] sm:$0xff]
        %v226 = vld [vmem:[#allocation6 + $0x8] sm:$0xff]
        %v227 = vld [vmem:[#allocation6 + $0x10] sm:$0xff]
        %v228 = vmax.f32 %v220, 0.0
        %v229 = vmax.f32 %v221, 0.0
        %v230 = vmax.f32 %v222, 0.0
        %231 = vst [vmem:[#allocation2] sm:$0xff] %v228
        %232 = vst [vmem:[#allocation2 + $0x8] sm:$0xff] %v229
        %233 = vst [vmem:[#allocation2 + $0x10] sm:$0xff] %v230
        %234 = vrot.lane.b32.xlu0 %v228, 127
        %v235 = vpop.permute.xlu0 %234
        %236 = vrot.lane.b32.xlu0 %v229, 127
        %v237 = vpop.permute.xlu0 %236
        %238 = vrot.lane.b32.xlu0 %v230, 127
        %v239 = vpop.permute.xlu0 %238
        %v240 = vlaneseq
        %v241 = vand.u32 %v240, 127
        %vm242 = vcmp.lt.s32.totalorder %v241, 127
        %v243 = vsel %vm242, %v237, %v239
        %v244 = vsel %vm242, %v235, %v237
        %v245 = vsel %vm242, %v239, %v235
        %246 = vst [vmem:[#allocation2 + $0x18] sm:$0xff] %v244
        %247 = vst [vmem:[#allocation2 + $0x20] sm:$0xff] %v243
        %248 = vst [vmem:[#allocation2 + $0x28] sm:$0xff] %v245
        %249 = vrot.lane.b32.xlu0 %v228, 109
        %v250 = vpop.permute.xlu0 %249
        %251 = vrot.lane.b32.xlu0 %v229, 109
        %v252 = vpop.permute.xlu0 %251
        %253 = vrot.lane.b32.xlu0 %v230, 109
        %v254 = vpop.permute.xlu0 %253
        %vm255 = vcmp.lt.s32.totalorder %v241, 109
        %v256 = vsel %vm255, %v252, %v254
        %v257 = vsel %vm255, %v250, %v252
        %v258 = vsel %vm255, %v254, %v250
        %259 = vst [vmem:[#allocation2 + $0x30] sm:$0xff] %v257
        %260 = vst [vmem:[#allocation2 + $0x38] sm:$0xff] %v256
        %261 = vst [vmem:[#allocation2 + $0x40] sm:$0xff] %v258
        %262 = vrot.lane.b32.xlu0 %v228, 108
        %v263 = vpop.permute.xlu0 %262
        %264 = vrot.lane.b32.xlu0 %v229, 108
        %v265 = vpop.permute.xlu0 %264
        %266 = vrot.lane.b32.xlu0 %v230, 108
        %v267 = vpop.permute.xlu0 %266
        %vm268 = vcmp.lt.s32.totalorder %v241, 108
        %v269 = vsel %vm268, %v265, %v267
        %v270 = vsel %vm268, %v263, %v265
        %v271 = vsel %vm268, %v267, %v263
        %272 = vst [vmem:[#allocation2 + $0x48] sm:$0xff] %v270
        %273 = vst [vmem:[#allocation2 + $0x50] sm:$0xff] %v269
        %274 = vst [vmem:[#allocation2 + $0x58] sm:$0xff] %v271
        %v275 = vld [vmem:[#allocation2] sm:$0xff]
        %v276 = vld [vmem:[#allocation2 + $0x8] sm:$0xff]
        %v277 = vld [vmem:[#allocation2 + $0x10] sm:$0xff]
        %v278 = vld [vmem:[#allocation2 + $0x18] sm:$0xff]
        %v279 = vld [vmem:[#allocation2 + $0x20] sm:$0xff]
        %v280 = vld [vmem:[#allocation2 + $0x28] sm:$0xff]
        %v281 = vld [vmem:[#allocation2 + $0x30] sm:$0xff]
        %v282 = vld [vmem:[#allocation2 + $0x38] sm:$0xff]
        %v283 = vld [vmem:[#allocation2 + $0x40] sm:$0xff]
        %v284 = vld [vmem:[#allocation2 + $0x48] sm:$0xff]
        %v285 = vld [vmem:[#allocation2 + $0x50] sm:$0xff]
        %v286 = vld [vmem:[#allocation2 + $0x58] sm:$0xff]
        %288 = vset.pattern.permute.xlu0 0
        %289 = vperm.xlu0 %288, %v224
        %v290 = vpop.permute.xlu0 %289
        %vm292 = vcmask 261120
        %v294 = vsel %vm292, %v225, 0
        %296 = vmatpush.msra.mxu0 0.0
        %297 = vmatpush.msra.mxu0 0.0
        %298 = vmatpush.msra.mxu0 0.0
        %299 = vmatpush.msra.mxu0 0.0
        %300 = vmatpush.msra.mxu0 0.0
        %301 = vmatpush.msra.mxu0 0.0
        %302 = vmatpush.msra.mxu0 0.0
        %303 = vmatpush.msra.mxu0 0.0
        %304 = vmatpush.msra.mxu0 0.0
        %305 = vmatpush.msra.mxu0 0.0
        %306 = vmatpush.msra.mxu0 0.0
        %307 = vmatpush.msra.mxu0 0.0
        %308 = vmatpush.msra.mxu0 %v284
        %309 = vmatpush.msra.mxu0 %v281
        %310 = vmatpush.msra.mxu0 %v278
        %311 = vmatpush.msra.mxu0 %v275
        %312 = vmatmul.f32.gmra.mxu0 %v294
        %v313 = vpop.f32.mrf.mxu0
        %v314 = vadd.f32 %v290, %v313
        %315 = vdwg.mxu0
        %316 = vmatpush.msra.mxu0 0.0
        %317 = vmatpush.msra.mxu0 0.0
        %318 = vmatpush.msra.mxu0 0.0
        %319 = vmatpush.msra.mxu0 0.0
        %320 = vmatpush.msra.mxu0 0.0
        %321 = vmatpush.msra.mxu0 0.0
        %322 = vmatpush.msra.mxu0 0.0
        %323 = vmatpush.msra.mxu0 0.0
        %324 = vmatpush.msra.mxu0 0.0
        %325 = vmatpush.msra.mxu0 0.0
        %326 = vmatpush.msra.mxu0 0.0
        %327 = vmatpush.msra.mxu0 0.0
        %328 = vmatpush.msra.mxu0 %v285
        %329 = vmatpush.msra.mxu0 %v282
        %330 = vmatpush.msra.mxu0 %v279
        %331 = vmatpush.msra.mxu0 %v276
        %332 = vmatmul.f32.gmra.mxu0 %v294
        %v333 = vpop.f32.mrf.mxu0
        %v334 = vadd.f32 %v290, %v333
        %335 = vdwg.mxu0
        %336 = vmatpush.msra.mxu0 0.0
        %337 = vmatpush.msra.mxu0 0.0
        %338 = vmatpush.msra.mxu0 0.0
        %339 = vmatpush.msra.mxu0 0.0
        %340 = vmatpush.msra.mxu0 0.0
        %341 = vmatpush.msra.mxu0 0.0
        %342 = vmatpush.msra.mxu0 0.0
        %343 = vmatpush.msra.mxu0 0.0
        %344 = vmatpush.msra.mxu0 0.0
        %345 = vmatpush.msra.mxu0 0.0
        %346 = vmatpush.msra.mxu0 0.0
        %347 = vmatpush.msra.mxu0 0.0
        %348 = vmatpush.msra.mxu0 %v286
        %349 = vmatpush.msra.mxu0 %v283
        %350 = vmatpush.msra.mxu0 %v280
        %351 = vmatpush.msra.mxu0 %v277
        %352 = vmatmul.f32.gmra.mxu0 %v294
        %v353 = vpop.f32.mrf.mxu0
        %v354 = vadd.f32 %v290, %v353
        %355 = vdwg.mxu0
        %v356 = vmax.f32 %v314, 0.0
        %v357 = vmax.f32 %v334, 0.0
        %v358 = vmax.f32 %v354, 0.0
        %v360 = vperm.slane %v223, 0
        %v361 = vperm.slane %v223, 1
        %v362 = vperm.slane %v223, 2
        %v366 = vmul.f32 %v356, %v360
        %v367 = vmul.f32 %v357, %v361
        %v368 = vmul.f32 %v358, %v362
        %369 = vst [vmem:[#allocation2] sm:$0xff] %v366
        %370 = vst [vmem:[#allocation2 + $0x8] sm:$0xff] %v367
        %371 = vst [vmem:[#allocation2 + $0x10] sm:$0xff] %v368
        %372 = vrot.lane.b32.xlu0 %v366, 127
        %v373 = vpop.permute.xlu0 %372
        %374 = vrot.lane.b32.xlu0 %v367, 127
        %v375 = vpop.permute.xlu0 %374
        %376 = vrot.lane.b32.xlu0 %v368, 127
        %v377 = vpop.permute.xlu0 %376
        %v378 = vsel %vm242, %v375, %v377
        %v379 = vsel %vm242, %v373, %v375
        %v380 = vsel %vm242, %v377, %v373
        %381 = vst [vmem:[#allocation2 + $0x18] sm:$0xff] %v379
        %382 = vst [vmem:[#allocation2 + $0x20] sm:$0xff] %v378
        %383 = vst [vmem:[#allocation2 + $0x28] sm:$0xff] %v380
        %384 = vrot.lane.b32.xlu0 %v366, 126
        %v385 = vpop.permute.xlu0 %384
        %386 = vrot.lane.b32.xlu0 %v367, 126
        %v387 = vpop.permute.xlu0 %386
        %388 = vrot.lane.b32.xlu0 %v368, 126
        %v389 = vpop.permute.xlu0 %388
        %vm390 = vcmp.lt.s32.totalorder %v241, 126
        %v391 = vsel %vm390, %v387, %v389
        %v392 = vsel %vm390, %v385, %v387
        %v393 = vsel %vm390, %v389, %v385
        %394 = vst [vmem:[#allocation2 + $0x30] sm:$0xff] %v392
        %395 = vst [vmem:[#allocation2 + $0x38] sm:$0xff] %v391
        %396 = vst [vmem:[#allocation2 + $0x40] sm:$0xff] %v393
        %397 = vrot.lane.b32.xlu0 %v366, 109
        %v398 = vpop.permute.xlu0 %397
        %399 = vrot.lane.b32.xlu0 %v367, 109
        %v400 = vpop.permute.xlu0 %399
        %401 = vrot.lane.b32.xlu0 %v368, 109
        %v402 = vpop.permute.xlu0 %401
        %v403 = vsel %vm255, %v400, %v402
        %v404 = vsel %vm255, %v398, %v400
        %v405 = vsel %vm255, %v402, %v398
        %406 = vst [vmem:[#allocation2 + $0x48] sm:$0xff] %v404
        %407 = vst [vmem:[#allocation2 + $0x50] sm:$0xff] %v403
        %408 = vst [vmem:[#allocation2 + $0x58] sm:$0xff] %v405
        %409 = vrot.lane.b32.xlu0 %v366, 108
        %v410 = vpop.permute.xlu0 %409
        %411 = vrot.lane.b32.xlu0 %v367, 108
        %v412 = vpop.permute.xlu0 %411
        %413 = vrot.lane.b32.xlu0 %v368, 108
        %v414 = vpop.permute.xlu0 %413
        %v415 = vsel %vm268, %v412, %v414
        %v416 = vsel %vm268, %v410, %v412
        %v417 = vsel %vm268, %v414, %v410
        %418 = vst [vmem:[#allocation2 + $0x60] sm:$0xff] %v416
        %419 = vst [vmem:[#allocation2 + $0x68] sm:$0xff] %v415
        %420 = vst [vmem:[#allocation2 + $0x70] sm:$0xff] %v417
        %421 = vrot.lane.b32.xlu0 %v366, 107
        %v422 = vpop.permute.xlu0 %421
        %423 = vrot.lane.b32.xlu0 %v367, 107
        %v424 = vpop.permute.xlu0 %423
        %425 = vrot.lane.b32.xlu0 %v368, 107
        %v426 = vpop.permute.xlu0 %425
        %vm427 = vcmp.lt.s32.totalorder %v241, 107
        %v428 = vsel %vm427, %v424, %v426
        %v429 = vsel %vm427, %v422, %v424
        %v430 = vsel %vm427, %v426, %v422
        %431 = vst [vmem:[#allocation2 + $0x78] sm:$0xff] %v429
        %432 = vst [vmem:[#allocation2 + $0x80] sm:$0xff] %v428
        %433 = vst [vmem:[#allocation2 + $0x88] sm:$0xff] %v430
        %434 = vrot.lane.b32.xlu0 %v366, 90
        %v435 = vpop.permute.xlu0 %434
        %436 = vrot.lane.b32.xlu0 %v367, 90
        %v437 = vpop.permute.xlu0 %436
        %438 = vrot.lane.b32.xlu0 %v368, 90
        %v439 = vpop.permute.xlu0 %438
        %vm440 = vcmp.lt.s32.totalorder %v241, 90
        %v441 = vsel %vm440, %v437, %v439
        %v442 = vsel %vm440, %v435, %v437
        %v443 = vsel %vm440, %v439, %v435
        %444 = vst [vmem:[#allocation2 + $0x90] sm:$0xff] %v442
        %445 = vst [vmem:[#allocation2 + $0x98] sm:$0xff] %v441
        %446 = vst [vmem:[#allocation2 + $0xa0] sm:$0xff] %v443
        %447 = vrot.lane.b32.xlu0 %v366, 89
        %v448 = vpop.permute.xlu0 %447
        %449 = vrot.lane.b32.xlu0 %v367, 89
        %v450 = vpop.permute.xlu0 %449
        %451 = vrot.lane.b32.xlu0 %v368, 89
        %v452 = vpop.permute.xlu0 %451
        %vm453 = vcmp.lt.s32.totalorder %v241, 89
        %v454 = vsel %vm453, %v450, %v452
        %v455 = vsel %vm453, %v448, %v450
        %v456 = vsel %vm453, %v452, %v448
        %457 = vst [vmem:[#allocation2 + $0xa8] sm:$0xff] %v455
        %458 = vst [vmem:[#allocation2 + $0xb0] sm:$0xff] %v454
        %459 = vst [vmem:[#allocation2 + $0xb8] sm:$0xff] %v456
        %460 = vrot.lane.b32.xlu0 %v366, 88
        %v461 = vpop.permute.xlu0 %460
        %462 = vrot.lane.b32.xlu0 %v367, 88
        %v463 = vpop.permute.xlu0 %462
        %464 = vrot.lane.b32.xlu0 %v368, 88
        %v465 = vpop.permute.xlu0 %464
        %vm466 = vcmp.lt.s32.totalorder %v241, 88
        %v467 = vsel %vm466, %v463, %v465
        %v468 = vsel %vm466, %v461, %v463
        %v469 = vsel %vm466, %v465, %v461
        %470 = vst [vmem:[#allocation2 + $0xc0] sm:$0xff] %v468
        %471 = vst [vmem:[#allocation2 + $0xc8] sm:$0xff] %v467
        %472 = vst [vmem:[#allocation2 + $0xd0] sm:$0xff] %v469
        %v473 = vld [vmem:[#allocation2] sm:$0xff]
        %v474 = vld [vmem:[#allocation2 + $0x8] sm:$0xff]
        %v475 = vld [vmem:[#allocation2 + $0x10] sm:$0xff]
        %v476 = vld [vmem:[#allocation2 + $0x18] sm:$0xff]
        %v477 = vld [vmem:[#allocation2 + $0x20] sm:$0xff]
        %v478 = vld [vmem:[#allocation2 + $0x28] sm:$0xff]
        %v479 = vld [vmem:[#allocation2 + $0x30] sm:$0xff]
        %v480 = vld [vmem:[#allocation2 + $0x38] sm:$0xff]
        %v481 = vld [vmem:[#allocation2 + $0x40] sm:$0xff]
        %v482 = vld [vmem:[#allocation2 + $0x48] sm:$0xff]
        %v483 = vld [vmem:[#allocation2 + $0x50] sm:$0xff]
        %v484 = vld [vmem:[#allocation2 + $0x58] sm:$0xff]
        %v485 = vld [vmem:[#allocation2 + $0x60] sm:$0xff]
        %v486 = vld [vmem:[#allocation2 + $0x68] sm:$0xff]
        %v487 = vld [vmem:[#allocation2 + $0x70] sm:$0xff]
        %v488 = vld [vmem:[#allocation2 + $0x78] sm:$0xff]
        %v489 = vld [vmem:[#allocation2 + $0x80] sm:$0xff]
        %v490 = vld [vmem:[#allocation2 + $0x88] sm:$0xff]
        %v491 = vld [vmem:[#allocation2 + $0x90] sm:$0xff]
        %v492 = vld [vmem:[#allocation2 + $0x98] sm:$0xff]
        %v493 = vld [vmem:[#allocation2 + $0xa0] sm:$0xff]
        %v494 = vld [vmem:[#allocation2 + $0xa8] sm:$0xff]
        %v495 = vld [vmem:[#allocation2 + $0xb0] sm:$0xff]
        %v496 = vld [vmem:[#allocation2 + $0xb8] sm:$0xff]
        %v497 = vld [vmem:[#allocation2 + $0xc0] sm:$0xff]
        %v498 = vld [vmem:[#allocation2 + $0xc8] sm:$0xff]
        %v499 = vld [vmem:[#allocation2 + $0xd0] sm:$0xff]
        %500 = vset.pattern.permute.xlu0 1
        %501 = vperm.xlu0 %500, %v224
        %v502 = vpop.permute.xlu0 %501
        %vm504 = vcmask 588800
        %v506 = vsel %vm504, %v226, 0
        %508 = vmatpush.msra.mxu0 0.0
        %509 = vmatpush.msra.mxu0 0.0
        %510 = vmatpush.msra.mxu0 0.0
        %511 = vmatpush.msra.mxu0 0.0
        %512 = vmatpush.msra.mxu0 0.0
        %513 = vmatpush.msra.mxu0 0.0
        %514 = vmatpush.msra.mxu0 0.0
        %515 = vmatpush.msra.mxu0 %v497
        %516 = vmatpush.msra.mxu0 %v494
        %517 = vmatpush.msra.mxu0 %v491
        %518 = vmatpush.msra.mxu0 %v488
        %519 = vmatpush.msra.mxu0 %v485
        %520 = vmatpush.msra.mxu0 %v482
        %521 = vmatpush.msra.mxu0 %v479
        %522 = vmatpush.msra.mxu0 %v476
        %523 = vmatpush.msra.mxu0 %v473
        %524 = vmatmul.f32.gmra.mxu0 %v506
        %v525 = vpop.f32.mrf.mxu0
        %v526 = vadd.f32 %v502, %v525
        %527 = vdwg.mxu0
        %528 = vmatpush.msra.mxu0 0.0
        %529 = vmatpush.msra.mxu0 0.0
        %530 = vmatpush.msra.mxu0 0.0
        %531 = vmatpush.msra.mxu0 0.0
        %532 = vmatpush.msra.mxu0 0.0
        %533 = vmatpush.msra.mxu0 0.0
        %534 = vmatpush.msra.mxu0 0.0
        %535 = vmatpush.msra.mxu0 %v498
        %536 = vmatpush.msra.mxu0 %v495
        %537 = vmatpush.msra.mxu0 %v492
        %538 = vmatpush.msra.mxu0 %v489
        %539 = vmatpush.msra.mxu0 %v486
        %540 = vmatpush.msra.mxu0 %v483
        %541 = vmatpush.msra.mxu0 %v480
        %542 = vmatpush.msra.mxu0 %v477
        %543 = vmatpush.msra.mxu0 %v474
        %544 = vmatmul.f32.gmra.mxu0 %v506
        %v545 = vpop.f32.mrf.mxu0
        %v546 = vadd.f32 %v502, %v545
        %547 = vdwg.mxu0
        %548 = vmatpush.msra.mxu0 0.0
        %549 = vmatpush.msra.mxu0 0.0
        %550 = vmatpush.msra.mxu0 0.0
        %551 = vmatpush.msra.mxu0 0.0
        %552 = vmatpush.msra.mxu0 0.0
        %553 = vmatpush.msra.mxu0 0.0
        %554 = vmatpush.msra.mxu0 0.0
        %555 = vmatpush.msra.mxu0 %v499
        %556 = vmatpush.msra.mxu0 %v496
        %557 = vmatpush.msra.mxu0 %v493
        %558 = vmatpush.msra.mxu0 %v490
        %559 = vmatpush.msra.mxu0 %v487
        %560 = vmatpush.msra.mxu0 %v484
        %561 = vmatpush.msra.mxu0 %v481
        %562 = vmatpush.msra.mxu0 %v478
        %563 = vmatpush.msra.mxu0 %v475
        %564 = vmatmul.f32.gmra.mxu0 %v506
        %v565 = vpop.f32.mrf.mxu0
        %v566 = vadd.f32 %v502, %v565
        %567 = vdwg.mxu0
        %v568 = vmax.f32 %v526, 0.0
        %v569 = vmax.f32 %v546, 0.0
        %v570 = vmax.f32 %v566, 0.0
        %571 = vst [vmem:[#allocation2] sm:$0xff] %v568
        %572 = vst [vmem:[#allocation2 + $0x8] sm:$0xff] %v569
        %573 = vst [vmem:[#allocation2 + $0x10] sm:$0xff] %v570
        %574 = vrot.lane.b32.xlu0 %v568, 127
        %v575 = vpop.permute.xlu0 %574
        %576 = vrot.lane.b32.xlu0 %v569, 127
        %v577 = vpop.permute.xlu0 %576
        %578 = vrot.lane.b32.xlu0 %v570, 127
        %v579 = vpop.permute.xlu0 %578
        %v580 = vsel %vm242, %v577, %v579
        %v581 = vsel %vm242, %v575, %v577
        %v582 = vsel %vm242, %v579, %v575
        %583 = vst [vmem:[#allocation2 + $0x18] sm:$0xff] %v581
        %584 = vst [vmem:[#allocation2 + $0x20] sm:$0xff] %v580
        %585 = vst [vmem:[#allocation2 + $0x28] sm:$0xff] %v582
        %586 = vrot.lane.b32.xlu0 %v568, 109
        %v587 = vpop.permute.xlu0 %586
        %588 = vrot.lane.b32.xlu0 %v569, 109
        %v589 = vpop.permute.xlu0 %588
        %590 = vrot.lane.b32.xlu0 %v570, 109
        %v591 = vpop.permute.xlu0 %590
        %v592 = vsel %vm255, %v589, %v591
        %v593 = vsel %vm255, %v587, %v589
        %v594 = vsel %vm255, %v591, %v587
        %595 = vst [vmem:[#allocation2 + $0x30] sm:$0xff] %v593
        %596 = vst [vmem:[#allocation2 + $0x38] sm:$0xff] %v592
        %597 = vst [vmem:[#allocation2 + $0x40] sm:$0xff] %v594
        %598 = vrot.lane.b32.xlu0 %v568, 108
        %v599 = vpop.permute.xlu0 %598
        %600 = vrot.lane.b32.xlu0 %v569, 108
        %v601 = vpop.permute.xlu0 %600
        %602 = vrot.lane.b32.xlu0 %v570, 108
        %v603 = vpop.permute.xlu0 %602
        %v604 = vsel %vm268, %v601, %v603
        %v605 = vsel %vm268, %v599, %v601
        %v606 = vsel %vm268, %v603, %v599
        %607 = vst [vmem:[#allocation2 + $0x48] sm:$0xff] %v605
        %608 = vst [vmem:[#allocation2 + $0x50] sm:$0xff] %v604
        %609 = vst [vmem:[#allocation2 + $0x58] sm:$0xff] %v606
        %v610 = vld [vmem:[#allocation2] sm:$0xff]
        %v611 = vld [vmem:[#allocation2 + $0x8] sm:$0xff]
        %v612 = vld [vmem:[#allocation2 + $0x10] sm:$0xff]
        %v613 = vld [vmem:[#allocation2 + $0x18] sm:$0xff]
        %v614 = vld [vmem:[#allocation2 + $0x20] sm:$0xff]
        %v615 = vld [vmem:[#allocation2 + $0x28] sm:$0xff]
        %v616 = vld [vmem:[#allocation2 + $0x30] sm:$0xff]
        %v617 = vld [vmem:[#allocation2 + $0x38] sm:$0xff]
        %v618 = vld [vmem:[#allocation2 + $0x40] sm:$0xff]
        %v619 = vld [vmem:[#allocation2 + $0x48] sm:$0xff]
        %v620 = vld [vmem:[#allocation2 + $0x50] sm:$0xff]
        %v621 = vld [vmem:[#allocation2 + $0x58] sm:$0xff]
        %622 = vset.pattern.permute.xlu0 2
        %623 = vperm.xlu0 %622, %v224
        %v624 = vpop.permute.xlu0 %623
        %v627 = vsel %vm292, %v227, 0
        %629 = vmatpush.msra.mxu0 0.0
        %630 = vmatpush.msra.mxu0 0.0
        %631 = vmatpush.msra.mxu0 0.0
        %632 = vmatpush.msra.mxu0 0.0
        %633 = vmatpush.msra.mxu0 0.0
        %634 = vmatpush.msra.mxu0 0.0
        %635 = vmatpush.msra.mxu0 0.0
        %636 = vmatpush.msra.mxu0 0.0
        %637 = vmatpush.msra.mxu0 0.0
        %638 = vmatpush.msra.mxu0 0.0
        %639 = vmatpush.msra.mxu0 0.0
        %640 = vmatpush.msra.mxu0 0.0
        %641 = vmatpush.msra.mxu0 %v619
        %642 = vmatpush.msra.mxu0 %v616
        %643 = vmatpush.msra.mxu0 %v613
        %644 = vmatpush.msra.mxu0 %v610
        %645 = vmatmul.f32.gmra.mxu0 %v627
        %v646 = vpop.f32.mrf.mxu0
        %v647 = vadd.f32 %v624, %v646
        %648 = vdwg.mxu0
        %649 = vmatpush.msra.mxu0 0.0
        %650 = vmatpush.msra.mxu0 0.0
        %651 = vmatpush.msra.mxu0 0.0
        %652 = vmatpush.msra.mxu0 0.0
        %653 = vmatpush.msra.mxu0 0.0
        %654 = vmatpush.msra.mxu0 0.0
        %655 = vmatpush.msra.mxu0 0.0
        %656 = vmatpush.msra.mxu0 0.0
        %657 = vmatpush.msra.mxu0 0.0
        %658 = vmatpush.msra.mxu0 0.0
        %659 = vmatpush.msra.mxu0 0.0
        %660 = vmatpush.msra.mxu0 0.0
        %661 = vmatpush.msra.mxu0 %v620
        %662 = vmatpush.msra.mxu0 %v617
        %663 = vmatpush.msra.mxu0 %v614
        %664 = vmatpush.msra.mxu0 %v611
        %665 = vmatmul.f32.gmra.mxu0 %v627
        %v666 = vpop.f32.mrf.mxu0
        %v667 = vadd.f32 %v624, %v666
        %668 = vdwg.mxu0
        %669 = vmatpush.msra.mxu0 0.0
        %670 = vmatpush.msra.mxu0 0.0
        %671 = vmatpush.msra.mxu0 0.0
        %672 = vmatpush.msra.mxu0 0.0
        %673 = vmatpush.msra.mxu0 0.0
        %674 = vmatpush.msra.mxu0 0.0
        %675 = vmatpush.msra.mxu0 0.0
        %676 = vmatpush.msra.mxu0 0.0
        %677 = vmatpush.msra.mxu0 0.0
        %678 = vmatpush.msra.mxu0 0.0
        %679 = vmatpush.msra.mxu0 0.0
        %680 = vmatpush.msra.mxu0 0.0
        %681 = vmatpush.msra.mxu0 %v621
        %682 = vmatpush.msra.mxu0 %v618
        %683 = vmatpush.msra.mxu0 %v615
        %684 = vmatpush.msra.mxu0 %v612
        %685 = vmatmul.f32.gmra.mxu0 %v627
        %v686 = vpop.f32.mrf.mxu0
        %v687 = vadd.f32 %v624, %v686
        %688 = vdwg.mxu0
        %689 = vrot.lane.b32.xlu0 %v220, 88
        %v690 = vpop.permute.xlu0 %689
        %691 = vrot.lane.b32.xlu0 %v221, 88
        %v692 = vpop.permute.xlu0 %691
        %693 = vrot.lane.b32.xlu0 %v222, 88
        %v694 = vpop.permute.xlu0 %693
        %v695 = vsel %vm466, %v692, %v694
        %v696 = vsel %vm466, %v690, %v692
        %v697 = vsel %vm466, %v694, %v690
        %v698 = vadd.f32 %v647, %v696
        %v699 = vadd.f32 %v667, %v695
        %v700 = vadd.f32 %v687, %v697
        %701 = vst [vmem:[%s219] sm:$0xff] %v698
        %702 = vst [vmem:[%s219 + $0x8] sm:$0xff] %v699
        %703 = vst [vmem:[%s219 + $0x10] sm:$0xff] %v700
        %s704 = sand.u32 %s97, 1
        %s705 = scalar_lea.sflag [#allocation5], %s704
        %s706 = sand.u32 %s97, 1
        %s707 = smul.addr %s706, 24
        %s708 = scalar_lea.vmem [#allocation9], %s707
        // Predicated region
        $region45: #{tpu_custom_call.1} parent=31 // pred_check
          %p709 = pneg %p107
        $region46: #{tpu_custom_call.1} parent=31 // pred_check_branch
          %711 = sbr.rel (%p709) target = $region48
        $region47: #{tpu_custom_call.1} parent=31 // pred_region
          %713 = vsyncadd %s705, 0
          %s714 = smul.addr %s21, 3
          %s715 = smul.addr %s714, 8
          %s716 = scalar_lea.hbm %s3, %s715
          %s718 = sshll.u32 %s708, 4
          %s719 = int_to_ptr.vmem [resolvable:$true] %s718
          %s720 = sshll.u32 %s716, 4
          %s721 = int_to_ptr.hbm [resolvable:$true] %s720
          %723 = dma.vmem_to_hbm [thread:$0]  %s719, 384, %s721, %s705
        $region48: #{tpu_custom_call.1} parent=31 // pred_fallthru
          _
      $region32: #{tpu_custom_call.1} parent=5 // pred_fallthru
        _
      %p724 = scmp.le.s32.totalorder 2, %s16
      // Predicated region
      $region49: #{tpu_custom_call.1} parent=5 // pred_check
        %p725 = pneg %p724
      $region50: #{tpu_custom_call.1} parent=5 // pred_check_branch
        %727 = sbr.rel (%p725) target = $region52
      $region51: #{tpu_custom_call.1} parent=5 // pred_region
        %s728 = ssub.s32 %s16, 2
        // Predicated region
        $region53: #{tpu_custom_call.1} parent=51 // pred_check
          %p729 = pneg %p113
        $region54: #{tpu_custom_call.1} parent=51 // pred_check_branch
          %731 = sbr.rel (%p729) target = $region56
        $region55: #{tpu_custom_call.1} parent=51 // pred_region
          %s732 = sand.u32 %s98, 1
          %s733 = scalar_lea.sflag [#allocation5], %s732
          %s734 = sand.u32 %s98, 1
          %s735 = smul.addr %s734, 24
          %s736 = scalar_lea.vmem [#allocation9], %s735
          %738 = dma.done %s733, 384
        $region56: #{tpu_custom_call.1} parent=51 // pred_fallthru
          _
      $region52: #{tpu_custom_call.1} parent=5 // pred_fallthru
        _
    $region6: #{tpu_custom_call.1} parent=1 // loop_footer
      %s20 = sadd.s32 1, %s16
    $region7: #{tpu_custom_call.1} parent=1 // loop_footer_branch
      %15 = sbr.rel target = $region3
    $region8: #{tpu_custom_call.1} parent=1 // loop_exit
      _
    %739 = vsyncpa [#allocation4], 1
    %s740 = scalar_lea.sflag [#allocation4], 1
    %741 = vsyncpa %s740, 1
    %742 = vsyncpa [#allocation7], 1
    %743 = vsyncpa [#allocation5], 1
    %s744 = scalar_lea.sflag [#allocation5], 1
    %745 = vsyncpa %s744, 1

</llo_original>
